<compile_context>
chip_gen: v6e
topology: v6e:2x2x1
jax: 0.10.0
libtpu: 0.0.40
codegen_flags: <defaults>
</compile_context>

<pallas_src>
import jax
import jax.numpy as jnp
from jax.experimental import pallas as pl
from jax.experimental.pallas import tpu as pltpu

HIDDEN = 16
LANES = 128


def _round_up(x, m):
    return ((x + m - 1) // m) * m


def mlp_kernel(x_ref, w1_ref, b1_ref, w2_ref, b2_ref, o_ref):
    # x_ref : VMEM (2, rb, 128)  -- x0 / x1 slabs, batch dense on sublanes+lanes
    # w1_ref: SMEM (32,)         -- flattened torch W1 (16,2): w1[j,k] = w1_ref[2*j+k]
    # b1_ref: SMEM (16,)
    # w2_ref: SMEM (16,)         -- W2 row (torch W2 is (1,16))
    # b2_ref: SMEM (1,)
    # o_ref : VMEM (rb, 128)
    x0 = x_ref[0]                                   # (rb, 128) dense slab
    x1 = x_ref[1]                                   # (rb, 128) dense slab

    acc = jnp.zeros(o_ref.shape, jnp.float32)
    # Fully unrolled over 16 hidden units with scalar weights from SMEM:
    # pure VPU FMAs on dense vregs; no (16,B) temporary, no XLU reduction.
    for j in range(HIDDEN):
        h = jnp.maximum(w1_ref[2 * j] * x0 + w1_ref[2 * j + 1] * x1 + b1_ref[j], 0.0)
        acc = acc + w2_ref[j] * h

    o_ref[...] = (acc + b2_ref[0]).astype(o_ref.dtype)


def multiplication_net_forward(x, w1, b1, w2, b2):
    """y = relu(x @ W1.T + b1) @ W2.T + b2  (torch Linear convention).

    x : (B, 2) f32
    w1: (16, 2), b1: (16,)
    w2: (1, 16), b2: (1,)
    returns (B, 1) f32
    """
    B = x.shape[0]
    if B == 0:
        return jnp.zeros((0, 1), jnp.float32)

    b_pad = _round_up(B, LANES)
    rows = b_pad // LANES

    # Host-side layout plumbing (fuses under jit): (B,2) -> (2, rows, 128),
    # batch dense on both sublanes and lanes.
    x_slab = jnp.pad(x.T.astype(jnp.float32),
                     ((0, 0), (0, b_pad - B))).reshape(2, rows, LANES)

    # Block sizing: blocks of up to 512 rows (= 65536 samples) amortize the
    # ~0.35us/step overhead; once B is large enough keep >=2 balanced grid
    # steps so v7x's second TensorCore is used ("parallel" axis).
    MAX_BLOCK_ROWS = 512
    if rows <= 8:
        block_rows = rows                                   # single tiny block
    else:
        block_rows = min(MAX_BLOCK_ROWS, _round_up(pl.cdiv(rows, 2), 8))
    grid = (pl.cdiv(rows, block_rows),)                     # ragged last block OK

    out_slab = pl.pallas_call(
        mlp_kernel,
        out_shape=jax.ShapeDtypeStruct((rows, LANES), jnp.float32),
        grid=grid,
        in_specs=[
            pl.BlockSpec((2, block_rows, LANES), lambda i: (0, i, 0)),  # x slab
            pl.BlockSpec(memory_space=pltpu.MemorySpace.SMEM),          # W1 flat
            pl.BlockSpec(memory_space=pltpu.MemorySpace.SMEM),          # b1
            pl.BlockSpec(memory_space=pltpu.MemorySpace.SMEM),          # W2 row
            pl.BlockSpec(memory_space=pltpu.MemorySpace.SMEM),          # b2
        ],
        out_specs=pl.BlockSpec((block_rows, LANES), lambda i: (i, 0)),  # dense out
        compiler_params=pltpu.CompilerParams(
            dimension_semantics=("parallel",),      # shards steps over v7x's 2 TCs
            vmem_limit_bytes=32 * 1024 * 1024,      # explicit; fits v5e/v6e/v7x
        ),
        cost_estimate=pl.CostEstimate(
            flops=7 * HIDDEN * b_pad,
            transcendentals=0,
            bytes_accessed=3 * 4 * b_pad + (2 * HIDDEN + HIDDEN + HIDDEN + 1) * 4,
        ),
    )(
        x_slab,
        jnp.asarray(w1, jnp.float32).reshape(2 * HIDDEN),
        jnp.asarray(b1, jnp.float32).reshape(HIDDEN),
        jnp.asarray(w2, jnp.float32).reshape(HIDDEN),
        jnp.asarray(b2, jnp.float32).reshape(1),
    )

    return out_slab.reshape(b_pad)[:B].reshape(B, 1)


def init_params(key):
    # Deterministic init mimicking nn.Linear's uniform(-1/sqrt(fan_in), 1/sqrt(fan_in)),
    # stored in torch convention: W1 (16, 2), b1 (16,), W2 (1, 16), b2 (1,).
    k1, k2, k3, k4 = jax.random.split(key, 4)
    bound1 = 1.0 / jnp.sqrt(2.0)
    bound2 = 1.0 / jnp.sqrt(16.0)
    w1 = jax.random.uniform(k1, (16, 2), jnp.float32, -bound1, bound1)
    b1 = jax.random.uniform(k2, (16,), jnp.float32, -bound1, bound1)
    w2 = jax.random.uniform(k3, (1, 16), jnp.float32, -bound2, bound2)
    b2 = jax.random.uniform(k4, (1,), jnp.float32, -bound2, bound2)
    return w1, b1, w2, b2


if __name__ == "__main__":
    key = jax.random.PRNGKey(0)
    k_params, k_x = jax.random.split(key)

    w1, b1, w2, b2 = init_params(k_params)

    batch = 8
    x = jax.random.uniform(k_x, (batch, 2), jnp.float32)  # pairs of numbers to "multiply"

    fwd = jax.jit(multiplication_net_forward)
    out = jax.block_until_ready(fwd(x, w1, b1, w2, b2))

    # Pure-JAX reference (torch convention: x @ W.T + b).
    ref = jnp.maximum(x @ w1.T + b1, 0.0) @ w2.T + b2
    assert out.shape == (batch, 1)
    assert jnp.allclose(out, ref, atol=1e-5, rtol=1e-5), (out, ref)

    print("KERNEL_OK")
</pallas_src>

<mosaic_0001>
module attributes {stable_mosaic.version = 11 : i64} {
  func.func @mlp_kernel(%arg0: i32, %arg1: memref<2x1x128xf32, #tpu.memory_space<vmem>>, %arg2: memref<32xf32, #tpu.memory_space<smem>>, %arg3: memref<16xf32, #tpu.memory_space<smem>>, %arg4: memref<16xf32, #tpu.memory_space<smem>>, %arg5: memref<1xf32, #tpu.memory_space<smem>>, %arg6: memref<1x128xf32, #tpu.memory_space<vmem>>) attributes {dimension_semantics = [#tpu.dimension_semantics<parallel>], iteration_bounds = array<i64: 1>, scalar_prefetch = 0 : i64, scratch_operands = 0 : i64, tpu.core_type = #tpu.core_type<tc>, window_params = [{transform_indices = @transform_0, window_bounds = array<i64: 2, 1, 128>}, {transform_indices = @transform_1, window_bounds = array<i64: 32>}, {transform_indices = @transform_2, window_bounds = array<i64: 16>}, {transform_indices = @transform_3, window_bounds = array<i64: 16>}, {transform_indices = @transform_4, window_bounds = array<i64: 1>}, {transform_indices = @transform_5, window_bounds = array<i64: 1, 128>}]} {
    %c0 = arith.constant 0 : index
    %c0_0 = arith.constant 0 : index
    %c0_1 = arith.constant 0 : index
    %0 = vector.load %arg1[%c0, %c0_0, %c0_1] : memref<2x1x128xf32, #tpu.memory_space<vmem>>, vector<1x1x128xf32>
    %1 = vector.shape_cast %0 : vector<1x1x128xf32> to vector<1x128xf32>
    %c1 = arith.constant 1 : index
    %c0_2 = arith.constant 0 : index
    %c0_3 = arith.constant 0 : index
    %2 = vector.load %arg1[%c1, %c0_2, %c0_3] : memref<2x1x128xf32, #tpu.memory_space<vmem>>, vector<1x1x128xf32>
    %3 = vector.shape_cast %2 : vector<1x1x128xf32> to vector<1x128xf32>
    %cst = arith.constant 0.000000e+00 : f32
    %4 = vector.broadcast %cst : f32 to vector<1x128xf32>
    %c0_4 = arith.constant 0 : index
    %5 = memref.load %arg2[%c0_4] : memref<32xf32, #tpu.memory_space<smem>>
    %6 = vector.broadcast %5 : f32 to vector<1x128xf32>
    %7 = arith.mulf %6, %1 : vector<1x128xf32>
    %c1_5 = arith.constant 1 : index
    %8 = memref.load %arg2[%c1_5] : memref<32xf32, #tpu.memory_space<smem>>
    %9 = vector.broadcast %8 : f32 to vector<1x128xf32>
    %10 = arith.mulf %9, %3 : vector<1x128xf32>
    %11 = arith.addf %7, %10 : vector<1x128xf32>
    %c0_6 = arith.constant 0 : index
    %12 = memref.load %arg3[%c0_6] : memref<16xf32, #tpu.memory_space<smem>>
    %13 = vector.broadcast %12 : f32 to vector<1x128xf32>
    %14 = arith.addf %11, %13 : vector<1x128xf32>
    %cst_7 = arith.constant 0.000000e+00 : f32
    %15 = vector.broadcast %cst_7 : f32 to vector<1x128xf32>
    %16 = arith.maximumf %14, %15 : vector<1x128xf32>
    %c0_8 = arith.constant 0 : index
    %17 = memref.load %arg4[%c0_8] : memref<16xf32, #tpu.memory_space<smem>>
    %18 = vector.broadcast %17 : f32 to vector<1x128xf32>
    %19 = arith.mulf %18, %16 : vector<1x128xf32>
    %20 = arith.addf %4, %19 : vector<1x128xf32>
    %c2 = arith.constant 2 : index
    %21 = memref.load %arg2[%c2] : memref<32xf32, #tpu.memory_space<smem>>
    %22 = vector.broadcast %21 : f32 to vector<1x128xf32>
    %23 = arith.mulf %22, %1 : vector<1x128xf32>
    %c3 = arith.constant 3 : index
    %24 = memref.load %arg2[%c3] : memref<32xf32, #tpu.memory_space<smem>>
    %25 = vector.broadcast %24 : f32 to vector<1x128xf32>
    %26 = arith.mulf %25, %3 : vector<1x128xf32>
    %27 = arith.addf %23, %26 : vector<1x128xf32>
    %c1_9 = arith.constant 1 : index
    %28 = memref.load %arg3[%c1_9] : memref<16xf32, #tpu.memory_space<smem>>
    %29 = vector.broadcast %28 : f32 to vector<1x128xf32>
    %30 = arith.addf %27, %29 : vector<1x128xf32>
    %cst_10 = arith.constant 0.000000e+00 : f32
    %31 = vector.broadcast %cst_10 : f32 to vector<1x128xf32>
    %32 = arith.maximumf %30, %31 : vector<1x128xf32>
    %c1_11 = arith.constant 1 : index
    %33 = memref.load %arg4[%c1_11] : memref<16xf32, #tpu.memory_space<smem>>
    %34 = vector.broadcast %33 : f32 to vector<1x128xf32>
    %35 = arith.mulf %34, %32 : vector<1x128xf32>
    %36 = arith.addf %20, %35 : vector<1x128xf32>
    %c4 = arith.constant 4 : index
    %37 = memref.load %arg2[%c4] : memref<32xf32, #tpu.memory_space<smem>>
    %38 = vector.broadcast %37 : f32 to vector<1x128xf32>
    %39 = arith.mulf %38, %1 : vector<1x128xf32>
    %c5 = arith.constant 5 : index
    %40 = memref.load %arg2[%c5] : memref<32xf32, #tpu.memory_space<smem>>
    %41 = vector.broadcast %40 : f32 to vector<1x128xf32>
    %42 = arith.mulf %41, %3 : vector<1x128xf32>
    %43 = arith.addf %39, %42 : vector<1x128xf32>
    %c2_12 = arith.constant 2 : index
    %44 = memref.load %arg3[%c2_12] : memref<16xf32, #tpu.memory_space<smem>>
    %45 = vector.broadcast %44 : f32 to vector<1x128xf32>
    %46 = arith.addf %43, %45 : vector<1x128xf32>
    %cst_13 = arith.constant 0.000000e+00 : f32
    %47 = vector.broadcast %cst_13 : f32 to vector<1x128xf32>
    %48 = arith.maximumf %46, %47 : vector<1x128xf32>
    %c2_14 = arith.constant 2 : index
    %49 = memref.load %arg4[%c2_14] : memref<16xf32, #tpu.memory_space<smem>>
    %50 = vector.broadcast %49 : f32 to vector<1x128xf32>
    %51 = arith.mulf %50, %48 : vector<1x128xf32>
    %52 = arith.addf %36, %51 : vector<1x128xf32>
    %c6 = arith.constant 6 : index
    %53 = memref.load %arg2[%c6] : memref<32xf32, #tpu.memory_space<smem>>
    %54 = vector.broadcast %53 : f32 to vector<1x128xf32>
    %55 = arith.mulf %54, %1 : vector<1x128xf32>
    %c7 = arith.constant 7 : index
    %56 = memref.load %arg2[%c7] : memref<32xf32, #tpu.memory_space<smem>>
    %57 = vector.broadcast %56 : f32 to vector<1x128xf32>
    %58 = arith.mulf %57, %3 : vector<1x128xf32>
    %59 = arith.addf %55, %58 : vector<1x128xf32>
    %c3_15 = arith.constant 3 : index
    %60 = memref.load %arg3[%c3_15] : memref<16xf32, #tpu.memory_space<smem>>
    %61 = vector.broadcast %60 : f32 to vector<1x128xf32>
    %62 = arith.addf %59, %61 : vector<1x128xf32>
    %cst_16 = arith.constant 0.000000e+00 : f32
    %63 = vector.broadcast %cst_16 : f32 to vector<1x128xf32>
    %64 = arith.maximumf %62, %63 : vector<1x128xf32>
    %c3_17 = arith.constant 3 : index
    %65 = memref.load %arg4[%c3_17] : memref<16xf32, #tpu.memory_space<smem>>
    %66 = vector.broadcast %65 : f32 to vector<1x128xf32>
    %67 = arith.mulf %66, %64 : vector<1x128xf32>
    %68 = arith.addf %52, %67 : vector<1x128xf32>
    %c8 = arith.constant 8 : index
    %69 = memref.load %arg2[%c8] : memref<32xf32, #tpu.memory_space<smem>>
    %70 = vector.broadcast %69 : f32 to vector<1x128xf32>
    %71 = arith.mulf %70, %1 : vector<1x128xf32>
    %c9 = arith.constant 9 : index
    %72 = memref.load %arg2[%c9] : memref<32xf32, #tpu.memory_space<smem>>
    %73 = vector.broadcast %72 : f32 to vector<1x128xf32>
    %74 = arith.mulf %73, %3 : vector<1x128xf32>
    %75 = arith.addf %71, %74 : vector<1x128xf32>
    %c4_18 = arith.constant 4 : index
    %76 = memref.load %arg3[%c4_18] : memref<16xf32, #tpu.memory_space<smem>>
    %77 = vector.broadcast %76 : f32 to vector<1x128xf32>
    %78 = arith.addf %75, %77 : vector<1x128xf32>
    %cst_19 = arith.constant 0.000000e+00 : f32
    %79 = vector.broadcast %cst_19 : f32 to vector<1x128xf32>
    %80 = arith.maximumf %78, %79 : vector<1x128xf32>
    %c4_20 = arith.constant 4 : index
    %81 = memref.load %arg4[%c4_20] : memref<16xf32, #tpu.memory_space<smem>>
    %82 = vector.broadcast %81 : f32 to vector<1x128xf32>
    %83 = arith.mulf %82, %80 : vector<1x128xf32>
    %84 = arith.addf %68, %83 : vector<1x128xf32>
    %c10 = arith.constant 10 : index
    %85 = memref.load %arg2[%c10] : memref<32xf32, #tpu.memory_space<smem>>
    %86 = vector.broadcast %85 : f32 to vector<1x128xf32>
    %87 = arith.mulf %86, %1 : vector<1x128xf32>
    %c11 = arith.constant 11 : index
    %88 = memref.load %arg2[%c11] : memref<32xf32, #tpu.memory_space<smem>>
    %89 = vector.broadcast %88 : f32 to vector<1x128xf32>
    %90 = arith.mulf %89, %3 : vector<1x128xf32>
    %91 = arith.addf %87, %90 : vector<1x128xf32>
    %c5_21 = arith.constant 5 : index
    %92 = memref.load %arg3[%c5_21] : memref<16xf32, #tpu.memory_space<smem>>
    %93 = vector.broadcast %92 : f32 to vector<1x128xf32>
    %94 = arith.addf %91, %93 : vector<1x128xf32>
    %cst_22 = arith.constant 0.000000e+00 : f32
    %95 = vector.broadcast %cst_22 : f32 to vector<1x128xf32>
    %96 = arith.maximumf %94, %95 : vector<1x128xf32>
    %c5_23 = arith.constant 5 : index
    %97 = memref.load %arg4[%c5_23] : memref<16xf32, #tpu.memory_space<smem>>
    %98 = vector.broadcast %97 : f32 to vector<1x128xf32>
    %99 = arith.mulf %98, %96 : vector<1x128xf32>
    %100 = arith.addf %84, %99 : vector<1x128xf32>
    %c12 = arith.constant 12 : index
    %101 = memref.load %arg2[%c12] : memref<32xf32, #tpu.memory_space<smem>>
    %102 = vector.broadcast %101 : f32 to vector<1x128xf32>
    %103 = arith.mulf %102, %1 : vector<1x128xf32>
    %c13 = arith.constant 13 : index
    %104 = memref.load %arg2[%c13] : memref<32xf32, #tpu.memory_space<smem>>
    %105 = vector.broadcast %104 : f32 to vector<1x128xf32>
    %106 = arith.mulf %105, %3 : vector<1x128xf32>
    %107 = arith.addf %103, %106 : vector<1x128xf32>
    %c6_24 = arith.constant 6 : index
    %108 = memref.load %arg3[%c6_24] : memref<16xf32, #tpu.memory_space<smem>>
    %109 = vector.broadcast %108 : f32 to vector<1x128xf32>
    %110 = arith.addf %107, %109 : vector<1x128xf32>
    %cst_25 = arith.constant 0.000000e+00 : f32
    %111 = vector.broadcast %cst_25 : f32 to vector<1x128xf32>
    %112 = arith.maximumf %110, %111 : vector<1x128xf32>
    %c6_26 = arith.constant 6 : index
    %113 = memref.load %arg4[%c6_26] : memref<16xf32, #tpu.memory_space<smem>>
    %114 = vector.broadcast %113 : f32 to vector<1x128xf32>
    %115 = arith.mulf %114, %112 : vector<1x128xf32>
    %116 = arith.addf %100, %115 : vector<1x128xf32>
    %c14 = arith.constant 14 : index
    %117 = memref.load %arg2[%c14] : memref<32xf32, #tpu.memory_space<smem>>
    %118 = vector.broadcast %117 : f32 to vector<1x128xf32>
    %119 = arith.mulf %118, %1 : vector<1x128xf32>
    %c15 = arith.constant 15 : index
    %120 = memref.load %arg2[%c15] : memref<32xf32, #tpu.memory_space<smem>>
    %121 = vector.broadcast %120 : f32 to vector<1x128xf32>
    %122 = arith.mulf %121, %3 : vector<1x128xf32>
    %123 = arith.addf %119, %122 : vector<1x128xf32>
    %c7_27 = arith.constant 7 : index
    %124 = memref.load %arg3[%c7_27] : memref<16xf32, #tpu.memory_space<smem>>
    %125 = vector.broadcast %124 : f32 to vector<1x128xf32>
    %126 = arith.addf %123, %125 : vector<1x128xf32>
    %cst_28 = arith.constant 0.000000e+00 : f32
    %127 = vector.broadcast %cst_28 : f32 to vector<1x128xf32>
    %128 = arith.maximumf %126, %127 : vector<1x128xf32>
    %c7_29 = arith.constant 7 : index
    %129 = memref.load %arg4[%c7_29] : memref<16xf32, #tpu.memory_space<smem>>
    %130 = vector.broadcast %129 : f32 to vector<1x128xf32>
    %131 = arith.mulf %130, %128 : vector<1x128xf32>
    %132 = arith.addf %116, %131 : vector<1x128xf32>
    %c16 = arith.constant 16 : index
    %133 = memref.load %arg2[%c16] : memref<32xf32, #tpu.memory_space<smem>>
    %134 = vector.broadcast %133 : f32 to vector<1x128xf32>
    %135 = arith.mulf %134, %1 : vector<1x128xf32>
    %c17 = arith.constant 17 : index
    %136 = memref.load %arg2[%c17] : memref<32xf32, #tpu.memory_space<smem>>
    %137 = vector.broadcast %136 : f32 to vector<1x128xf32>
    %138 = arith.mulf %137, %3 : vector<1x128xf32>
    %139 = arith.addf %135, %138 : vector<1x128xf32>
    %c8_30 = arith.constant 8 : index
    %140 = memref.load %arg3[%c8_30] : memref<16xf32, #tpu.memory_space<smem>>
    %141 = vector.broadcast %140 : f32 to vector<1x128xf32>
    %142 = arith.addf %139, %141 : vector<1x128xf32>
    %cst_31 = arith.constant 0.000000e+00 : f32
    %143 = vector.broadcast %cst_31 : f32 to vector<1x128xf32>
    %144 = arith.maximumf %142, %143 : vector<1x128xf32>
    %c8_32 = arith.constant 8 : index
    %145 = memref.load %arg4[%c8_32] : memref<16xf32, #tpu.memory_space<smem>>
    %146 = vector.broadcast %145 : f32 to vector<1x128xf32>
    %147 = arith.mulf %146, %144 : vector<1x128xf32>
    %148 = arith.addf %132, %147 : vector<1x128xf32>
    %c18 = arith.constant 18 : index
    %149 = memref.load %arg2[%c18] : memref<32xf32, #tpu.memory_space<smem>>
    %150 = vector.broadcast %149 : f32 to vector<1x128xf32>
    %151 = arith.mulf %150, %1 : vector<1x128xf32>
    %c19 = arith.constant 19 : index
    %152 = memref.load %arg2[%c19] : memref<32xf32, #tpu.memory_space<smem>>
    %153 = vector.broadcast %152 : f32 to vector<1x128xf32>
    %154 = arith.mulf %153, %3 : vector<1x128xf32>
    %155 = arith.addf %151, %154 : vector<1x128xf32>
    %c9_33 = arith.constant 9 : index
    %156 = memref.load %arg3[%c9_33] : memref<16xf32, #tpu.memory_space<smem>>
    %157 = vector.broadcast %156 : f32 to vector<1x128xf32>
    %158 = arith.addf %155, %157 : vector<1x128xf32>
    %cst_34 = arith.constant 0.000000e+00 : f32
    %159 = vector.broadcast %cst_34 : f32 to vector<1x128xf32>
    %160 = arith.maximumf %158, %159 : vector<1x128xf32>
    %c9_35 = arith.constant 9 : index
    %161 = memref.load %arg4[%c9_35] : memref<16xf32, #tpu.memory_space<smem>>
    %162 = vector.broadcast %161 : f32 to vector<1x128xf32>
    %163 = arith.mulf %162, %160 : vector<1x128xf32>
    %164 = arith.addf %148, %163 : vector<1x128xf32>
    %c20 = arith.constant 20 : index
    %165 = memref.load %arg2[%c20] : memref<32xf32, #tpu.memory_space<smem>>
    %166 = vector.broadcast %165 : f32 to vector<1x128xf32>
    %167 = arith.mulf %166, %1 : vector<1x128xf32>
    %c21 = arith.constant 21 : index
    %168 = memref.load %arg2[%c21] : memref<32xf32, #tpu.memory_space<smem>>
    %169 = vector.broadcast %168 : f32 to vector<1x128xf32>
    %170 = arith.mulf %169, %3 : vector<1x128xf32>
    %171 = arith.addf %167, %170 : vector<1x128xf32>
    %c10_36 = arith.constant 10 : index
    %172 = memref.load %arg3[%c10_36] : memref<16xf32, #tpu.memory_space<smem>>
    %173 = vector.broadcast %172 : f32 to vector<1x128xf32>
    %174 = arith.addf %171, %173 : vector<1x128xf32>
    %cst_37 = arith.constant 0.000000e+00 : f32
    %175 = vector.broadcast %cst_37 : f32 to vector<1x128xf32>
    %176 = arith.maximumf %174, %175 : vector<1x128xf32>
    %c10_38 = arith.constant 10 : index
    %177 = memref.load %arg4[%c10_38] : memref<16xf32, #tpu.memory_space<smem>>
    %178 = vector.broadcast %177 : f32 to vector<1x128xf32>
    %179 = arith.mulf %178, %176 : vector<1x128xf32>
    %180 = arith.addf %164, %179 : vector<1x128xf32>
    %c22 = arith.constant 22 : index
    %181 = memref.load %arg2[%c22] : memref<32xf32, #tpu.memory_space<smem>>
    %182 = vector.broadcast %181 : f32 to vector<1x128xf32>
    %183 = arith.mulf %182, %1 : vector<1x128xf32>
    %c23 = arith.constant 23 : index
    %184 = memref.load %arg2[%c23] : memref<32xf32, #tpu.memory_space<smem>>
    %185 = vector.broadcast %184 : f32 to vector<1x128xf32>
    %186 = arith.mulf %185, %3 : vector<1x128xf32>
    %187 = arith.addf %183, %186 : vector<1x128xf32>
    %c11_39 = arith.constant 11 : index
    %188 = memref.load %arg3[%c11_39] : memref<16xf32, #tpu.memory_space<smem>>
    %189 = vector.broadcast %188 : f32 to vector<1x128xf32>
    %190 = arith.addf %187, %189 : vector<1x128xf32>
    %cst_40 = arith.constant 0.000000e+00 : f32
    %191 = vector.broadcast %cst_40 : f32 to vector<1x128xf32>
    %192 = arith.maximumf %190, %191 : vector<1x128xf32>
    %c11_41 = arith.constant 11 : index
    %193 = memref.load %arg4[%c11_41] : memref<16xf32, #tpu.memory_space<smem>>
    %194 = vector.broadcast %193 : f32 to vector<1x128xf32>
    %195 = arith.mulf %194, %192 : vector<1x128xf32>
    %196 = arith.addf %180, %195 : vector<1x128xf32>
    %c24 = arith.constant 24 : index
    %197 = memref.load %arg2[%c24] : memref<32xf32, #tpu.memory_space<smem>>
    %198 = vector.broadcast %197 : f32 to vector<1x128xf32>
    %199 = arith.mulf %198, %1 : vector<1x128xf32>
    %c25 = arith.constant 25 : index
    %200 = memref.load %arg2[%c25] : memref<32xf32, #tpu.memory_space<smem>>
    %201 = vector.broadcast %200 : f32 to vector<1x128xf32>
    %202 = arith.mulf %201, %3 : vector<1x128xf32>
    %203 = arith.addf %199, %202 : vector<1x128xf32>
    %c12_42 = arith.constant 12 : index
    %204 = memref.load %arg3[%c12_42] : memref<16xf32, #tpu.memory_space<smem>>
    %205 = vector.broadcast %204 : f32 to vector<1x128xf32>
    %206 = arith.addf %203, %205 : vector<1x128xf32>
    %cst_43 = arith.constant 0.000000e+00 : f32
    %207 = vector.broadcast %cst_43 : f32 to vector<1x128xf32>
    %208 = arith.maximumf %206, %207 : vector<1x128xf32>
    %c12_44 = arith.constant 12 : index
    %209 = memref.load %arg4[%c12_44] : memref<16xf32, #tpu.memory_space<smem>>
    %210 = vector.broadcast %209 : f32 to vector<1x128xf32>
    %211 = arith.mulf %210, %208 : vector<1x128xf32>
    %212 = arith.addf %196, %211 : vector<1x128xf32>
    %c26 = arith.constant 26 : index
    %213 = memref.load %arg2[%c26] : memref<32xf32, #tpu.memory_space<smem>>
    %214 = vector.broadcast %213 : f32 to vector<1x128xf32>
    %215 = arith.mulf %214, %1 : vector<1x128xf32>
    %c27 = arith.constant 27 : index
    %216 = memref.load %arg2[%c27] : memref<32xf32, #tpu.memory_space<smem>>
    %217 = vector.broadcast %216 : f32 to vector<1x128xf32>
    %218 = arith.mulf %217, %3 : vector<1x128xf32>
    %219 = arith.addf %215, %218 : vector<1x128xf32>
    %c13_45 = arith.constant 13 : index
    %220 = memref.load %arg3[%c13_45] : memref<16xf32, #tpu.memory_space<smem>>
    %221 = vector.broadcast %220 : f32 to vector<1x128xf32>
    %222 = arith.addf %219, %221 : vector<1x128xf32>
    %cst_46 = arith.constant 0.000000e+00 : f32
    %223 = vector.broadcast %cst_46 : f32 to vector<1x128xf32>
    %224 = arith.maximumf %222, %223 : vector<1x128xf32>
    %c13_47 = arith.constant 13 : index
    %225 = memref.load %arg4[%c13_47] : memref<16xf32, #tpu.memory_space<smem>>
    %226 = vector.broadcast %225 : f32 to vector<1x128xf32>
    %227 = arith.mulf %226, %224 : vector<1x128xf32>
    %228 = arith.addf %212, %227 : vector<1x128xf32>
    %c28 = arith.constant 28 : index
    %229 = memref.load %arg2[%c28] : memref<32xf32, #tpu.memory_space<smem>>
    %230 = vector.broadcast %229 : f32 to vector<1x128xf32>
    %231 = arith.mulf %230, %1 : vector<1x128xf32>
    %c29 = arith.constant 29 : index
    %232 = memref.load %arg2[%c29] : memref<32xf32, #tpu.memory_space<smem>>
    %233 = vector.broadcast %232 : f32 to vector<1x128xf32>
    %234 = arith.mulf %233, %3 : vector<1x128xf32>
    %235 = arith.addf %231, %234 : vector<1x128xf32>
    %c14_48 = arith.constant 14 : index
    %236 = memref.load %arg3[%c14_48] : memref<16xf32, #tpu.memory_space<smem>>
    %237 = vector.broadcast %236 : f32 to vector<1x128xf32>
    %238 = arith.addf %235, %237 : vector<1x128xf32>
    %cst_49 = arith.constant 0.000000e+00 : f32
    %239 = vector.broadcast %cst_49 : f32 to vector<1x128xf32>
    %240 = arith.maximumf %238, %239 : vector<1x128xf32>
    %c14_50 = arith.constant 14 : index
    %241 = memref.load %arg4[%c14_50] : memref<16xf32, #tpu.memory_space<smem>>
    %242 = vector.broadcast %241 : f32 to vector<1x128xf32>
    %243 = arith.mulf %242, %240 : vector<1x128xf32>
    %244 = arith.addf %228, %243 : vector<1x128xf32>
    %c30 = arith.constant 30 : index
    %245 = memref.load %arg2[%c30] : memref<32xf32, #tpu.memory_space<smem>>
    %246 = vector.broadcast %245 : f32 to vector<1x128xf32>
    %247 = arith.mulf %246, %1 : vector<1x128xf32>
    %c31 = arith.constant 31 : index
    %248 = memref.load %arg2[%c31] : memref<32xf32, #tpu.memory_space<smem>>
    %249 = vector.broadcast %248 : f32 to vector<1x128xf32>
    %250 = arith.mulf %249, %3 : vector<1x128xf32>
    %251 = arith.addf %247, %250 : vector<1x128xf32>
    %c15_51 = arith.constant 15 : index
    %252 = memref.load %arg3[%c15_51] : memref<16xf32, #tpu.memory_space<smem>>
    %253 = vector.broadcast %252 : f32 to vector<1x128xf32>
    %254 = arith.addf %251, %253 : vector<1x128xf32>
    %cst_52 = arith.constant 0.000000e+00 : f32
    %255 = vector.broadcast %cst_52 : f32 to vector<1x128xf32>
    %256 = arith.maximumf %254, %255 : vector<1x128xf32>
    %c15_53 = arith.constant 15 : index
    %257 = memref.load %arg4[%c15_53] : memref<16xf32, #tpu.memory_space<smem>>
    %258 = vector.broadcast %257 : f32 to vector<1x128xf32>
    %259 = arith.mulf %258, %256 : vector<1x128xf32>
    %260 = arith.addf %244, %259 : vector<1x128xf32>
    %c0_54 = arith.constant 0 : index
    %261 = memref.load %arg5[%c0_54] : memref<1xf32, #tpu.memory_space<smem>>
    %262 = vector.broadcast %261 : f32 to vector<1x128xf32>
    %263 = arith.addf %260, %262 : vector<1x128xf32>
    %c0_55 = arith.constant 0 : index
    %c0_56 = arith.constant 0 : index
    %264 = vector.load %arg6[%c0_55, %c0_56] : memref<1x128xf32, #tpu.memory_space<vmem>>, vector<1x128xf32>
    tpu.vector_store %arg6[%c0_55, %c0_56], %263 {strides = array<i32>} : memref<1x128xf32, #tpu.memory_space<vmem>>, vector<1x128xf32>,
    return
  }
  func.func @transform_0(%arg0: i32) -> (i32, i32, i32) {
    %c0_i32 = arith.constant 0 : i32
    %c0_i32_0 = arith.constant 0 : i32
    %c0_i32_1 = arith.constant 0 : i32
    return %c0_i32, %arg0, %c0_i32_0 : i32, i32, i32
  }
  func.func @transform_1(%arg0: i32) -> i32 {
    %c0_i32 = arith.constant 0 : i32
    %c0_i32_0 = arith.constant 0 : i32
    return %c0_i32 : i32
  }
  func.func @transform_2(%arg0: i32) -> i32 {
    %c0_i32 = arith.constant 0 : i32
    %c0_i32_0 = arith.constant 0 : i32
    return %c0_i32 : i32
  }
  func.func @transform_3(%arg0: i32) -> i32 {
    %c0_i32 = arith.constant 0 : i32
    %c0_i32_0 = arith.constant 0 : i32
    return %c0_i32 : i32
  }
  func.func @transform_4(%arg0: i32) -> i32 {
    %c0_i32 = arith.constant 0 : i32
    %c0_i32_0 = arith.constant 0 : i32
    return %c0_i32 : i32
  }
  func.func @transform_5(%arg0: i32) -> (i32, i32) {
    %c0_i32 = arith.constant 0 : i32
    %c0_i32_0 = arith.constant 0 : i32
    return %arg0, %c0_i32 : i32, i32
  }
}

</mosaic_0001>

<llo_original>
// kernel: multiplication_net_forward.1
$region0: #{multiplication_net_forward.1}
  #allocation0 [shape = 'u32[]', space=smem, size = 0x4, offset = 0x4, fixed_abs, tag = 'smem constant byte address 0x4 - core index']
  #allocation1 [shape = 'u32[144,128]{1,0:T(1,128)}', space=vmem, size = 0x12000, scoped, tag = 'internal scratch']
  #allocation2 [shape = 'f32[1]{0:T(128)S(6)}', space=smem, size = 0x200, scoped, tag = 'scoped memory for multiplication_net_forward.1']
  %s0 = inlined_call_operand.vmem [shape: f32[2,1,128], index: 0, kind: input, shape index: {}]
  %s1 = inlined_call_operand.vmem [shape: f32[32], index: 1, kind: input, shape index: {}]
  %s2 = inlined_call_operand.vmem [shape: f32[16], index: 2, kind: input, shape index: {}]
  %s3 = inlined_call_operand.vmem [shape: f32[16], index: 3, kind: input, shape index: {}]
  %s4 = inlined_call_operand.<no memory space> [shape: f32[1], index: 4, kind: input, shape index: {}]
  %s5 = inlined_call_operand.vmem [shape: f32[1,128], index: 5, kind: output, shape index: {}]
  %s6 = sld [smem:[#allocation0]]
  $region42: #{multiplication_net_forward.1} parent=0
    _
  %s8 = ssub.s32 1, %s6
  %s9 = scalar_select 0, %s8, %s6
  %10 = sst [smem:[#allocation2]] %s4
  $region1: #{multiplication_net_forward.1} parent=0
    #allocation3 [shape = 'u8[512]{0}', space=smem, size = 0x200, scoped, tag = 'input window, operand 1, single buffered']
    #allocation4 [shape = 's32[1]{0}', space=sflag, size = 0x4, scoped, tag = 'scoped memory for multiplication_net_forward.1']
    #allocation5 [shape = 'u8[512]{0}', space=smem, size = 0x200, scoped, tag = 'input window, operand 2, single buffered']
    #allocation6 [shape = 's32[1]{0}', space=sflag, size = 0x4, scoped, tag = 'scoped memory for multiplication_net_forward.1']
    #allocation7 [shape = 'u8[512]{0}', space=smem, size = 0x200, scoped, tag = 'input window, operand 3, single buffered']
    %11 = vsyncpa [#allocation4], 0
    %12 = vsyncpa [#allocation6], 0
    // Predicated region
    $region2: #{multiplication_net_forward.1} parent=1 // pred_check
      _
    $region3: #{multiplication_net_forward.1} parent=1 // pred_check_branch
      %14 = sbr.rel (0) target = $region5
    $region4: #{multiplication_net_forward.1} parent=1 // pred_region
      _
    $region5: #{multiplication_net_forward.1} parent=1 // pred_fallthru
      _
    // Predicated region
    $region6: #{multiplication_net_forward.1} parent=1 // pred_check
      _
    $region7: #{multiplication_net_forward.1} parent=1 // pred_check_branch
      %16 = sbr.rel (0) target = $region9
    $region8: #{multiplication_net_forward.1} parent=1 // pred_region
      %s18 = ssub.s32 16, 16
      %19 = vsyncadd [#allocation4], %s18
      %s21 = sshll.u32 %s1, 4
      %s22 = int_to_ptr.vmem [resolvable:$true] %s21
      %24 = dma.vmem_to_smem %s22, 16, [#allocation3], [#allocation4]
    $region9: #{multiplication_net_forward.1} parent=1 // pred_fallthru
      _
    // Predicated region
    $region10: #{multiplication_net_forward.1} parent=1 // pred_check
      _
    $region11: #{multiplication_net_forward.1} parent=1 // pred_check_branch
      %26 = sbr.rel (0) target = $region13
    $region12: #{multiplication_net_forward.1} parent=1 // pred_region
      %s28 = ssub.s32 16, 16
      %29 = vsyncadd [#allocation6], %s28
      %s31 = sshll.u32 %s2, 4
      %s32 = int_to_ptr.vmem [resolvable:$true] %s31
      %34 = dma.vmem_to_smem %s32, 16, [#allocation5], [#allocation6]
    $region13: #{multiplication_net_forward.1} parent=1 // pred_fallthru
      _
    // Predicated region
    $region14: #{multiplication_net_forward.1} parent=1 // pred_check
      _
    $region15: #{multiplication_net_forward.1} parent=1 // pred_check_branch
      %36 = sbr.rel (0) target = $region17
    $region16: #{multiplication_net_forward.1} parent=1 // pred_region
      %s38 = ssub.s32 16, 16
      %39 = vsyncadd [#allocation6], %s38
      %s41 = sshll.u32 %s3, 4
      %s42 = int_to_ptr.vmem [resolvable:$true] %s41
      %44 = dma.vmem_to_smem %s42, 16, [#allocation7], [#allocation6]
    $region17: #{multiplication_net_forward.1} parent=1 // pred_fallthru
      _
    // Predicated region
    $region18: #{multiplication_net_forward.1} parent=1 // pred_check
      _
    $region19: #{multiplication_net_forward.1} parent=1 // pred_check_branch
      %46 = sbr.rel (0) target = $region21
    $region20: #{multiplication_net_forward.1} parent=1 // pred_region
      _
    $region21: #{multiplication_net_forward.1} parent=1 // pred_fallthru
      _
    // Predicated region
    $region22: #{multiplication_net_forward.1} parent=1 // pred_check
      _
    $region23: #{multiplication_net_forward.1} parent=1 // pred_check_branch
      %48 = sbr.rel (0) target = $region25
    $region24: #{multiplication_net_forward.1} parent=1 // pred_region
      %49 = dma.done [#allocation4], 16
    $region25: #{multiplication_net_forward.1} parent=1 // pred_fallthru
      _
    // Predicated region
    $region26: #{multiplication_net_forward.1} parent=1 // pred_check
      _
    $region27: #{multiplication_net_forward.1} parent=1 // pred_check_branch
      %51 = sbr.rel (0) target = $region29
    $region28: #{multiplication_net_forward.1} parent=1 // pred_region
      %52 = dma.done [#allocation6], 16
    $region29: #{multiplication_net_forward.1} parent=1 // pred_fallthru
      _
    // Predicated region
    $region30: #{multiplication_net_forward.1} parent=1 // pred_check
      _
    $region31: #{multiplication_net_forward.1} parent=1 // pred_check_branch
      %54 = sbr.rel (0) target = $region33
    $region32: #{multiplication_net_forward.1} parent=1 // pred_region
      %55 = dma.done [#allocation6], 16
    $region33: #{multiplication_net_forward.1} parent=1 // pred_fallthru
      _
    %56 = sfence
    %v57 = vld [vmem:[%s0] sm:$0x1]
    %s58 = scalar_lea.vmem %s0, 1
    %v59 = vld [vmem:[%s58] sm:$0x1]
    %s60 = sld [smem:[#allocation3]]
    %v61 = vstv %s60
    %v62 = vmul.f32 %v61, %v57
    %s63 = sld [smem:[#allocation3 + $0x1]]
    %v64 = vstv %s63
    %v65 = vmul.f32 %v64, %v59
    %v66 = vadd.f32 %v62, %v65
    %s67 = sld [smem:[#allocation5]]
    %v68 = vstv %s67
    %v69 = vadd.f32 %v66, %v68
    %v70 = vmax.f32 %v69, 0.0
    %s71 = sld [smem:[#allocation7]]
    %v72 = vstv %s71
    %v73 = vmul.f32 %v72, %v70
    %v74 = vadd.f32 %v73, 0.0
    %s75 = sld [smem:[#allocation3 + $0x2]]
    %v76 = vstv %s75
    %v77 = vmul.f32 %v76, %v57
    %s78 = sld [smem:[#allocation3 + $0x3]]
    %v79 = vstv %s78
    %v80 = vmul.f32 %v79, %v59
    %v81 = vadd.f32 %v77, %v80
    %s82 = sld [smem:[#allocation5 + $0x1]]
    %v83 = vstv %s82
    %v84 = vadd.f32 %v81, %v83
    %v85 = vmax.f32 %v84, 0.0
    %s86 = sld [smem:[#allocation7 + $0x1]]
    %v87 = vstv %s86
    %v88 = vmul.f32 %v87, %v85
    %v89 = vadd.f32 %v74, %v88
    %s90 = sld [smem:[#allocation3 + $0x4]]
    %v91 = vstv %s90
    %v92 = vmul.f32 %v91, %v57
    %s93 = sld [smem:[#allocation3 + $0x5]]
    %v94 = vstv %s93
    %v95 = vmul.f32 %v94, %v59
    %v96 = vadd.f32 %v92, %v95
    %s97 = sld [smem:[#allocation5 + $0x2]]
    %v98 = vstv %s97
    %v99 = vadd.f32 %v96, %v98
    %v100 = vmax.f32 %v99, 0.0
    %s101 = sld [smem:[#allocation7 + $0x2]]
    %v102 = vstv %s101
    %v103 = vmul.f32 %v102, %v100
    %v104 = vadd.f32 %v89, %v103
    %s105 = sld [smem:[#allocation3 + $0x6]]
    %v106 = vstv %s105
    %v107 = vmul.f32 %v106, %v57
    %s108 = sld [smem:[#allocation3 + $0x7]]
    %v109 = vstv %s108
    %v110 = vmul.f32 %v109, %v59
    %v111 = vadd.f32 %v107, %v110
    %s112 = sld [smem:[#allocation5 + $0x3]]
    %v113 = vstv %s112
    %v114 = vadd.f32 %v111, %v113
    %v115 = vmax.f32 %v114, 0.0
    %s116 = sld [smem:[#allocation7 + $0x3]]
    %v117 = vstv %s116
    %v118 = vmul.f32 %v117, %v115
    %v119 = vadd.f32 %v104, %v118
    %s120 = sld [smem:[#allocation3 + $0x8]]
    %v121 = vstv %s120
    %v122 = vmul.f32 %v121, %v57
    %s123 = sld [smem:[#allocation3 + $0x9]]
    %v124 = vstv %s123
    %v125 = vmul.f32 %v124, %v59
    %v126 = vadd.f32 %v122, %v125
    %s127 = sld [smem:[#allocation5 + $0x4]]
    %v128 = vstv %s127
    %v129 = vadd.f32 %v126, %v128
    %v130 = vmax.f32 %v129, 0.0
    %s131 = sld [smem:[#allocation7 + $0x4]]
    %v132 = vstv %s131
    %v133 = vmul.f32 %v132, %v130
    %v134 = vadd.f32 %v119, %v133
    %s135 = sld [smem:[#allocation3 + $0xa]]
    %v136 = vstv %s135
    %v137 = vmul.f32 %v136, %v57
    %s138 = sld [smem:[#allocation3 + $0xb]]
    %v139 = vstv %s138
    %v140 = vmul.f32 %v139, %v59
    %v141 = vadd.f32 %v137, %v140
    %s142 = sld [smem:[#allocation5 + $0x5]]
    %v143 = vstv %s142
    %v144 = vadd.f32 %v141, %v143
    %v145 = vmax.f32 %v144, 0.0
    %s146 = sld [smem:[#allocation7 + $0x5]]
    %v147 = vstv %s146
    %v148 = vmul.f32 %v147, %v145
    %v149 = vadd.f32 %v134, %v148
    %s150 = sld [smem:[#allocation3 + $0xc]]
    %v151 = vstv %s150
    %v152 = vmul.f32 %v151, %v57
    %s153 = sld [smem:[#allocation3 + $0xd]]
    %v154 = vstv %s153
    %v155 = vmul.f32 %v154, %v59
    %v156 = vadd.f32 %v152, %v155
    %s157 = sld [smem:[#allocation5 + $0x6]]
    %v158 = vstv %s157
    %v159 = vadd.f32 %v156, %v158
    %v160 = vmax.f32 %v159, 0.0
    %s161 = sld [smem:[#allocation7 + $0x6]]
    %v162 = vstv %s161
    %v163 = vmul.f32 %v162, %v160
    %v164 = vadd.f32 %v149, %v163
    %s165 = sld [smem:[#allocation3 + $0xe]]
    %v166 = vstv %s165
    %v167 = vmul.f32 %v166, %v57
    %s168 = sld [smem:[#allocation3 + $0xf]]
    %v169 = vstv %s168
    %v170 = vmul.f32 %v169, %v59
    %v171 = vadd.f32 %v167, %v170
    %s172 = sld [smem:[#allocation5 + $0x7]]
    %v173 = vstv %s172
    %v174 = vadd.f32 %v171, %v173
    %v175 = vmax.f32 %v174, 0.0
    %s176 = sld [smem:[#allocation7 + $0x7]]
    %v177 = vstv %s176
    %v178 = vmul.f32 %v177, %v175
    %v179 = vadd.f32 %v164, %v178
    %s180 = sld [smem:[#allocation3 + $0x10]]
    %v181 = vstv %s180
    %v182 = vmul.f32 %v181, %v57
    %s183 = sld [smem:[#allocation3 + $0x11]]
    %v184 = vstv %s183
    %v185 = vmul.f32 %v184, %v59
    %v186 = vadd.f32 %v182, %v185
    %s187 = sld [smem:[#allocation5 + $0x8]]
    %v188 = vstv %s187
    %v189 = vadd.f32 %v186, %v188
    %v190 = vmax.f32 %v189, 0.0
    %s191 = sld [smem:[#allocation7 + $0x8]]
    %v192 = vstv %s191
    %v193 = vmul.f32 %v192, %v190
    %v194 = vadd.f32 %v179, %v193
    %s195 = sld [smem:[#allocation3 + $0x12]]
    %v196 = vstv %s195
    %v197 = vmul.f32 %v196, %v57
    %s198 = sld [smem:[#allocation3 + $0x13]]
    %v199 = vstv %s198
    %v200 = vmul.f32 %v199, %v59
    %v201 = vadd.f32 %v197, %v200
    %s202 = sld [smem:[#allocation5 + $0x9]]
    %v203 = vstv %s202
    %v204 = vadd.f32 %v201, %v203
    %v205 = vmax.f32 %v204, 0.0
    %s206 = sld [smem:[#allocation7 + $0x9]]
    %v207 = vstv %s206
    %v208 = vmul.f32 %v207, %v205
    %v209 = vadd.f32 %v194, %v208
    %s210 = sld [smem:[#allocation3 + $0x14]]
    %v211 = vstv %s210
    %v212 = vmul.f32 %v211, %v57
    %s213 = sld [smem:[#allocation3 + $0x15]]
    %v214 = vstv %s213
    %v215 = vmul.f32 %v214, %v59
    %v216 = vadd.f32 %v212, %v215
    %s217 = sld [smem:[#allocation5 + $0xa]]
    %v218 = vstv %s217
    %v219 = vadd.f32 %v216, %v218
    %v220 = vmax.f32 %v219, 0.0
    %s221 = sld [smem:[#allocation7 + $0xa]]
    %v222 = vstv %s221
    %v223 = vmul.f32 %v222, %v220
    %v224 = vadd.f32 %v209, %v223
    %s225 = sld [smem:[#allocation3 + $0x16]]
    %v226 = vstv %s225
    %v227 = vmul.f32 %v226, %v57
    %s228 = sld [smem:[#allocation3 + $0x17]]
    %v229 = vstv %s228
    %v230 = vmul.f32 %v229, %v59
    %v231 = vadd.f32 %v227, %v230
    %s232 = sld [smem:[#allocation5 + $0xb]]
    %v233 = vstv %s232
    %v234 = vadd.f32 %v231, %v233
    %v235 = vmax.f32 %v234, 0.0
    %s236 = sld [smem:[#allocation7 + $0xb]]
    %v237 = vstv %s236
    %v238 = vmul.f32 %v237, %v235
    %v239 = vadd.f32 %v224, %v238
    %s240 = sld [smem:[#allocation3 + $0x18]]
    %v241 = vstv %s240
    %v242 = vmul.f32 %v241, %v57
    %s243 = sld [smem:[#allocation3 + $0x19]]
    %v244 = vstv %s243
    %v245 = vmul.f32 %v244, %v59
    %v246 = vadd.f32 %v242, %v245
    %s247 = sld [smem:[#allocation5 + $0xc]]
    %v248 = vstv %s247
    %v249 = vadd.f32 %v246, %v248
    %v250 = vmax.f32 %v249, 0.0
    %s251 = sld [smem:[#allocation7 + $0xc]]
    %v252 = vstv %s251
    %v253 = vmul.f32 %v252, %v250
    %v254 = vadd.f32 %v239, %v253
    %s255 = sld [smem:[#allocation3 + $0x1a]]
    %v256 = vstv %s255
    %v257 = vmul.f32 %v256, %v57
    %s258 = sld [smem:[#allocation3 + $0x1b]]
    %v259 = vstv %s258
    %v260 = vmul.f32 %v259, %v59
    %v261 = vadd.f32 %v257, %v260
    %s262 = sld [smem:[#allocation5 + $0xd]]
    %v263 = vstv %s262
    %v264 = vadd.f32 %v261, %v263
    %v265 = vmax.f32 %v264, 0.0
    %s266 = sld [smem:[#allocation7 + $0xd]]
    %v267 = vstv %s266
    %v268 = vmul.f32 %v267, %v265
    %v269 = vadd.f32 %v254, %v268
    %s270 = sld [smem:[#allocation3 + $0x1c]]
    %v271 = vstv %s270
    %v272 = vmul.f32 %v271, %v57
    %s273 = sld [smem:[#allocation3 + $0x1d]]
    %v274 = vstv %s273
    %v275 = vmul.f32 %v274, %v59
    %v276 = vadd.f32 %v272, %v275
    %s277 = sld [smem:[#allocation5 + $0xe]]
    %v278 = vstv %s277
    %v279 = vadd.f32 %v276, %v278
    %v280 = vmax.f32 %v279, 0.0
    %s281 = sld [smem:[#allocation7 + $0xe]]
    %v282 = vstv %s281
    %v283 = vmul.f32 %v282, %v280
    %v284 = vadd.f32 %v269, %v283
    %s285 = sld [smem:[#allocation3 + $0x1e]]
    %v286 = vstv %s285
    %v287 = vmul.f32 %v286, %v57
    %s288 = sld [smem:[#allocation3 + $0x1f]]
    %v289 = vstv %s288
    %v290 = vmul.f32 %v289, %v59
    %v291 = vadd.f32 %v287, %v290
    %s292 = sld [smem:[#allocation5 + $0xf]]
    %v293 = vstv %s292
    %v294 = vadd.f32 %v291, %v293
    %v295 = vmax.f32 %v294, 0.0
    %s296 = sld [smem:[#allocation7 + $0xf]]
    %v297 = vstv %s296
    %v298 = vmul.f32 %v297, %v295
    %v299 = vadd.f32 %v284, %v298
    %s300 = sld [smem:[#allocation2]]
    %v301 = vstv %s300
    %v302 = vadd.f32 %v299, %v301
    %303 = vst [vmem:[%s5] sm:$0x1] %v302
    // Predicated region
    $region34: #{multiplication_net_forward.1} parent=1 // pred_check
      _
    $region35: #{multiplication_net_forward.1} parent=1 // pred_check_branch
      %305 = sbr.rel (0) target = $region37
    $region36: #{multiplication_net_forward.1} parent=1 // pred_region
      _
    $region37: #{multiplication_net_forward.1} parent=1 // pred_fallthru
      _
    // Predicated region
    $region38: #{multiplication_net_forward.1} parent=1 // pred_check
      _
    $region39: #{multiplication_net_forward.1} parent=1 // pred_check_branch
      %307 = sbr.rel (0) target = $region41
    $region40: #{multiplication_net_forward.1} parent=1 // pred_region
      _
    $region41: #{multiplication_net_forward.1} parent=1 // pred_fallthru
      _
    %308 = vsyncpa [#allocation4], 1
    %309 = vsyncpa [#allocation6], 1

</llo_original>
